<compile_context>
chip_gen: v7x
topology: tpu7x:2x2x1
jax: 0.10.0
libtpu: 0.0.40
codegen_flags: <defaults>
</compile_context>

<pallas_src>
import jax
import jax.numpy as jnp
from jax.experimental import pallas as pl
from jax.experimental.pallas import tpu as pltpu

_LANE = 128
_SUBLANE = 8
_MAX_COL_TILE = 16 * _LANE * _SUBLANE  # 16384 columns max per block


def build_pe_matrix(d_model: int, max_seq_len: int = 80) -> jnp.ndarray:
    """Reproduces the (quirky) PyTorch loop exactly.

    for i in range(0, d_model, 2):
        pe[pos, i]   = sin(pos / 10000 ** (2 * i / d_model))
        pe[pos, i+1] = cos(pos / 10000 ** (2 * i / d_model))
    (`i` already steps by 2 and the exponent uses 2*i, not the usual i.)
    """
    pos = jnp.arange(max_seq_len, dtype=jnp.float32)[:, None]          # (L, 1)
    i_even = jnp.arange(0, d_model, 2, dtype=jnp.float32)[None, :]     # (1, D/2)
    denom = jnp.power(jnp.float32(10000.0), 2.0 * i_even / d_model)
    angle = pos / denom                                                # (L, D/2)
    pe = jnp.stack([jnp.sin(angle), jnp.cos(angle)], axis=-1)          # interleave
    return pe.reshape(max_seq_len, d_model).astype(jnp.float32)


def _pe_add_kernel(x_ref, pe_ref, o_ref):
    # x_ref: (tr, tc); pe_ref: (1, tc).  jnp broadcasting over sublanes keeps
    # the add a whole-vreg VPU op; no per-iteration reshape of pe.
    o_ref[...] = x_ref[...] + pe_ref[...]


def _block_budget():
    """Per-generation x-block byte target and optional scoped-VMEM override."""
    kind = ""
    try:
        kind = jax.devices()[0].device_kind.lower()
    except Exception:
        pass
    if ("v7" in kind) or ("tpu7" in kind) or ("7x" in kind):
        # v7x: 3.2 TB/s HBM, 64 MiB physical VMEM per TC -> big blocks, raise
        # scoped limit but leave headroom.
        return 8 << 20, 48 << 20
    if "v6" in kind:
        # v6e: 32 MiB scoped default, 128 MiB physical -> 6 MiB blocks fit with
        # double buffering; bump the limit for safety margin.
        return 6 << 20, 48 << 20
    # v5e / unknown: stay under the 16 MiB scoped-VMEM default (4 * 3 MiB = 12).
    return 3 << 20, None


def _pick_tiles(rows: int, cols: int, itemsize: int, target_bytes: int):
    """Lane-dense column tile + dtype-aware sublane-rounded row tile."""
    # Packed-sublane rounding: f32 -> 8, bf16/f16 -> 16, int8/fp8 -> 32.
    sub = _SUBLANE * max(1, 4 // max(1, itemsize))
    # cols is pre-padded to a multiple of 128, so tc is always 128-aligned.
    tc = min(cols, _MAX_COL_TILE)
    want_rows = max(1, target_bytes // (tc * itemsize))
    if rows <= sub:
        tr = rows                                   # full extent: always legal
    else:
        tr = min(rows, max(sub, (want_rows // sub) * sub))
    return tr, tc


def positional_encoder(x: jnp.ndarray, pe: jnp.ndarray) -> jnp.ndarray:
    """x: (B, S, D); pe: (max_seq_len, D). Returns x + pe[:S] broadcast over B."""
    B, S, D = x.shape
    SD = S * D

    # Wrapper-side glue: static seq slice, dtype match, lane-dense 2-D views.
    pe_row = pe[:S, :].astype(x.dtype).reshape(1, SD)
    x2 = x.reshape(B, SD)

    # Guard awkward (S, D): pad the flattened column axis to a multiple of 128
    # so the column tile never falls back to a huge full-extent block.
    SD_pad = ((SD + _LANE - 1) // _LANE) * _LANE
    if SD_pad != SD:
        pad = SD_pad - SD
        x2 = jnp.pad(x2, ((0, 0), (0, pad)))
        pe_row = jnp.pad(pe_row, ((0, 0), (0, pad)))

    itemsize = jnp.dtype(x.dtype).itemsize
    target_bytes, vmem_limit = _block_budget()
    tr, tc = _pick_tiles(B, SD_pad, itemsize, target_bytes)

    # Column-tile axis outermost, batch-tile axis innermost: the pe block index
    # only changes on the slow axis, so the pipeline re-fetches pe once per
    # column slab instead of once per grid step.
    grid = (pl.cdiv(SD_pad, tc), pl.cdiv(B, tr))

    out2 = pl.pallas_call(
        _pe_add_kernel,
        out_shape=jax.ShapeDtypeStruct((B, SD_pad), x.dtype),
        grid=grid,
        in_specs=[
            pl.BlockSpec((tr, tc), lambda j, i: (i, j)),   # x tile
            pl.BlockSpec((1, tc), lambda j, i: (0, j)),    # pe row slab (batch-invariant)
        ],
        out_specs=pl.BlockSpec((tr, tc), lambda j, i: (i, j)),
        compiler_params=pltpu.CompilerParams(
            dimension_semantics=("parallel", "parallel"),
            vmem_limit_bytes=vmem_limit,
        ),
    )(x2, pe_row)

    if SD_pad != SD:
        out2 = out2[:, :SD]
    return out2.reshape(B, S, D)


if __name__ == "__main__":
    d_model = 32
    max_seq_len = 80
    batch = 2
    seq = 8

    key = jax.random.PRNGKey(0)
    x = jax.random.normal(key, (batch, seq, d_model), dtype=jnp.float32)

    pe = build_pe_matrix(d_model, max_seq_len)

    out = positional_encoder(x, pe)
    out = jax.block_until_ready(out)

    # sanity check against a pure-JAX reference
    ref = x + pe[None, :seq, :]
    assert out.shape == (batch, seq, d_model)
    assert jnp.allclose(out, ref, atol=1e-6), "mismatch vs reference"

    print("KERNEL_OK")
</pallas_src>

<mosaic_0001>
module attributes {stable_mosaic.version = 11 : i64} {
  func.func @_pe_add_kernel(%arg0: i32, %arg1: i32, %arg2: memref<2x256xf32, #tpu.memory_space<vmem>>, %arg3: memref<1x256xf32, #tpu.memory_space<vmem>>, %arg4: memref<2x256xf32, #tpu.memory_space<vmem>>) attributes {dimension_semantics = [#tpu.dimension_semantics<parallel>, #tpu.dimension_semantics<parallel>], iteration_bounds = array<i64: 1, 1>, scalar_prefetch = 0 : i64, scratch_operands = 0 : i64, tpu.core_type = #tpu.core_type<tc>, window_params = [{transform_indices = @transform_0, window_bounds = array<i64: 2, 256>}, {transform_indices = @transform_1, window_bounds = array<i64: 1, 256>}, {transform_indices = @transform_2, window_bounds = array<i64: 2, 256>}]} {
    %c0 = arith.constant 0 : index
    %c0_0 = arith.constant 0 : index
    %0 = vector.load %arg2[%c0, %c0_0] : memref<2x256xf32, #tpu.memory_space<vmem>>, vector<2x256xf32>
    %c0_1 = arith.constant 0 : index
    %c0_2 = arith.constant 0 : index
    %1 = vector.load %arg3[%c0_1, %c0_2] : memref<1x256xf32, #tpu.memory_space<vmem>>, vector<1x256xf32>
    %2 = vector.broadcast %1 : vector<1x256xf32> to vector<2x256xf32>
    %3 = arith.addf %0, %2 : vector<2x256xf32>
    %c0_3 = arith.constant 0 : index
    %c0_4 = arith.constant 0 : index
    %4 = vector.load %arg4[%c0_3, %c0_4] : memref<2x256xf32, #tpu.memory_space<vmem>>, vector<2x256xf32>
    tpu.vector_store %arg4[%c0_3, %c0_4], %3 {strides = array<i32>} : memref<2x256xf32, #tpu.memory_space<vmem>>, vector<2x256xf32>,
    return
  }
  func.func @transform_0(%arg0: i32, %arg1: i32) -> (i32, i32) {
    %c0_i32 = arith.constant 0 : i32
    return %arg1, %arg0 : i32, i32
  }
  func.func @transform_1(%arg0: i32, %arg1: i32) -> (i32, i32) {
    %c0_i32 = arith.constant 0 : i32
    %c0_i32_0 = arith.constant 0 : i32
    return %c0_i32, %arg0 : i32, i32
  }
  func.func @transform_2(%arg0: i32, %arg1: i32) -> (i32, i32) {
    %c0_i32 = arith.constant 0 : i32
    return %arg1, %arg0 : i32, i32
  }
}

</mosaic_0001>

<llo_original>
// kernel: tpu_custom_call.1
$region0: #{tpu_custom_call.1}
  #allocation0 [shape = 'u32[]', space=smem, size = 0x4, offset = 0x4, fixed_abs, tag = 'smem constant byte address 0x4 - core index']
  #allocation1 [shape = 'u32[144,128]{1,0:T(1,128)}', space=vmem, size = 0x12000, scoped, tag = 'internal scratch']
  %s0 = inlined_call_operand.hbm [shape: f32[2,256], index: 0, kind: input, shape index: {}]
  %s1 = inlined_call_operand.vmem [shape: f32[1,256], index: 1, kind: input, shape index: {}]
  %s2 = inlined_call_operand.hbm [shape: f32[2,256], index: 2, kind: output, shape index: {}]
  %s3 = sld [smem:[#allocation0]]
  $region22: #{tpu_custom_call.1} parent=0
    _
  %s5 = ssub.s32 1, %s3
  %s6 = scalar_select 0, %s5, %s3
  $region1: #{tpu_custom_call.1} parent=0
    #allocation2 [shape = 'u8[2048]{0}', space=vmem, size = 0x800, scoped, tag = 'input window, operand 0, single buffered']
    #allocation3 [shape = 's32[1]{0}', space=sflag, size = 0x4, scoped, tag = 'scoped memory for tpu_custom_call.1']
    #allocation4 [shape = 's32[1]{0}', space=sflag, size = 0x4, scoped, tag = 'scoped memory for tpu_custom_call.1']
    #allocation5 [shape = 'u8[2048]{0}', space=vmem, size = 0x800, scoped, tag = 'output window, operand 0, single buffered']
    %7 = vsyncpa [#allocation3], 0
    %8 = vsyncpa [#allocation4], 0
    // Predicated region
    $region2: #{tpu_custom_call.1} parent=1 // pred_check
      _
    $region3: #{tpu_custom_call.1} parent=1 // pred_check_branch
      %10 = sbr.rel (0) target = $region5
    $region4: #{tpu_custom_call.1} parent=1 // pred_region
      %s12 = ssub.s32 64, 64
      %13 = vsyncadd [#allocation3], %s12
      %s15 = sshll.u32 [#allocation2], 4
      %s16 = int_to_ptr.vmem [resolvable:$true] %s15
      %18 = dma.hbm_to_vmem [thread:$0]  %s0, 64, %s16, [#allocation3]
    $region5: #{tpu_custom_call.1} parent=1 // pred_fallthru
      _
    // Predicated region
    $region6: #{tpu_custom_call.1} parent=1 // pred_check
      _
    $region7: #{tpu_custom_call.1} parent=1 // pred_check_branch
      %20 = sbr.rel (0) target = $region9
    $region8: #{tpu_custom_call.1} parent=1 // pred_region
      _
    $region9: #{tpu_custom_call.1} parent=1 // pred_fallthru
      _
    // Predicated region
    $region10: #{tpu_custom_call.1} parent=1 // pred_check
      _
    $region11: #{tpu_custom_call.1} parent=1 // pred_check_branch
      %22 = sbr.rel (0) target = $region13
    $region12: #{tpu_custom_call.1} parent=1 // pred_region
      %23 = dma.done [#allocation3], 64
    $region13: #{tpu_custom_call.1} parent=1 // pred_fallthru
      _
    %v24 = vld [vmem:[#allocation2] sm:$0xf]
    %v25 = vld [vmem:[%s1] sm:$0x3]
    %v27 = vlaneseq
    %v28 = vshrl.u32 %v27, 7
    %v29 = vsub.s32 0, %v28
    %v30 = vrot.slane %v25, %v29
    %v31 = vlaneseq
    %v32 = vshrl.u32 %v31, 7
    %v33 = vsub.s32 1, %v32
    %v34 = vrot.slane %v25, %v33
    %v35 = vcombine.low %v30, %v34
    %v37 = vunpack.c.l.s4 1983009808
    %v38 = vunpack.c.0.s8 %v37
    %v39 = vlaneseq
    %v40 = vshrl.u32 %v39, 7
    %v41 = vsub.s32 %v38, %v40
    %v42 = vrot.slane %v35, %v41
    %v44 = vadd.f32 %v24, %v42
    %45 = vst [vmem:[#allocation5] sm:$0xf] %v44
    // Predicated region
    $region14: #{tpu_custom_call.1} parent=1 // pred_check
      _
    $region15: #{tpu_custom_call.1} parent=1 // pred_check_branch
      %47 = sbr.rel (0) target = $region17
    $region16: #{tpu_custom_call.1} parent=1 // pred_region
      %s49 = ssub.s32 64, 64
      %50 = vsyncadd [#allocation4], %s49
      %s52 = sshll.u32 [#allocation5], 4
      %s53 = int_to_ptr.vmem [resolvable:$true] %s52
      %55 = dma.vmem_to_hbm [thread:$0]  %s53, 64, %s2, [#allocation4]
    $region17: #{tpu_custom_call.1} parent=1 // pred_fallthru
      _
    // Predicated region
    $region18: #{tpu_custom_call.1} parent=1 // pred_check
      _
    $region19: #{tpu_custom_call.1} parent=1 // pred_check_branch
      %57 = sbr.rel (0) target = $region21
    $region20: #{tpu_custom_call.1} parent=1 // pred_region
      %58 = dma.done [#allocation4], 64
    $region21: #{tpu_custom_call.1} parent=1 // pred_fallthru
      _
    %59 = vsyncpa [#allocation3], 1
    %60 = vsyncpa [#allocation4], 1

</llo_original>
